<compile_context>
chip_gen: v7x
topology: tpu7x:2x2x1
jax: 0.10.0
libtpu: 0.0.40
codegen_flags: <defaults>
</compile_context>

<pallas_src>
import functools

import jax
import jax.numpy as jnp
from jax.experimental import pallas as pl
from jax.experimental.pallas import tpu as pltpu


# ----------------------------------------------------------------------------
# Kernel 1: dense linear layer  y = x @ W + b, tiled over rows (M).
# bf16 MXU inputs (W pre-cast to bf16 at the param level), f32 accumulation.
# ----------------------------------------------------------------------------
def _linear_kernel(x_ref, w_ref, b_ref, o_ref):
    x = x_ref[...].astype(jnp.bfloat16)        # no-op when x is already bf16
    y = jnp.dot(x, w_ref[...], preferred_element_type=jnp.float32)
    o_ref[...] = (y + b_ref[...]).astype(o_ref.dtype)


def linear(x2d, w_bf16, b_f32, *, out_dtype, tm=512):
    """x2d: (M, Cin), w_bf16: (Cin, Cout) bf16, b_f32: (1, Cout) f32."""
    M, K = x2d.shape
    Cout = w_bf16.shape[1]
    tm = min(tm, M)
    return pl.pallas_call(
        _linear_kernel,
        out_shape=jax.ShapeDtypeStruct((M, Cout), out_dtype),
        grid=(pl.cdiv(M, tm),),
        in_specs=[
            pl.BlockSpec((tm, K), lambda i: (i, 0)),
            pl.BlockSpec((K, Cout), lambda i: (0, 0)),
            pl.BlockSpec((1, Cout), lambda i: (0, 0)),
        ],
        out_specs=pl.BlockSpec((tm, Cout), lambda i: (i, 0)),
        compiler_params=pltpu.CompilerParams(
            dimension_semantics=("parallel",)),
    )(x2d, w_bf16, b_f32)


# ----------------------------------------------------------------------------
# Kernel 2: top-m attention core.  Grid = (B, N // tq); each step processes
# ALL heads for one query tile and writes a merged-head, lane-dense (tq, C)
# output block.  q_ref is the (1, tq, 3C) query-row block, kv_ref the
# (1, N, 3C) key/value block (same array, two BlockSpecs).
# ----------------------------------------------------------------------------
def _topm_attn_kernel(q_ref, kv_ref, o_ref, *, num_heads, head_dim, scale,
                      top_m):
    C = num_heads * head_dim
    outs = []
    for h in range(num_heads):                         # static, fully unrolled
        lo = h * head_dim
        # Ref-side static slices: never materialize the full (N, 3C) slab.
        q = q_ref[0, :, lo:lo + head_dim]              # (tq, D) bf16
        k = kv_ref[0, :, C + lo:C + lo + head_dim]     # (N,  D) bf16
        v = kv_ref[0, :, 2 * C + lo:2 * C + lo + head_dim]

        # Fold the softmax scale into q (a (tq, D) multiply in f32, re-cast).
        qs = (q.astype(jnp.float32) * scale).astype(jnp.bfloat16)

        # s[n, m] = sum_d qs[n, d] * k[m, d]  (no materialized k.T), f32 acc.
        s = jax.lax.dot_general(
            qs, k, (((1,), (1,)), ((), ())),
            preferred_element_type=jnp.float32)        # (tq, N) f32

        # Global row max is always inside the kept top-m set: it doubles as
        # the softmax max and the seed of the iterated-max threshold search.
        row_max = jnp.max(s, axis=-1, keepdims=True)   # (tq, 1)

        if top_m > 1:
            def body(_, carry):
                work, cur = carry
                work = jnp.where(work >= cur, -jnp.inf, work)
                return work, jnp.max(work, axis=-1, keepdims=True)

            _, thr = jax.lax.fori_loop(
                0, top_m - 1, body, (s, row_max), unroll=top_m <= 8)
        else:
            thr = row_max                              # m-th largest per row

        keep = s >= thr                                # (tq, N) bool
        e = jnp.where(keep, jnp.exp(s - row_max), 0.0)  # (tq, N) f32
        denom = jnp.sum(e, axis=-1, keepdims=True)     # (tq, 1) f32

        # Unnormalized PV matmul in bf16 (weights in (0, 1]), then normalize
        # the small (tq, D) result; denom >= 1 so approx reciprocal is safe.
        pv = jax.lax.dot_general(
            e.astype(jnp.bfloat16), v, (((1,), (0,)), ((), ())),
            preferred_element_type=jnp.float32)        # (tq, D) f32
        outs.append(pv * pl.reciprocal(denom, approx=True))

    # One unmasked, lane-dense, merged-head store for the whole query tile.
    o_ref[0] = jnp.concatenate(outs, axis=-1).astype(o_ref.dtype)


def _pick_query_tile(n, cap=256):
    """Largest multiple-of-8 divisor of n not exceeding cap (or n itself)."""
    if n <= cap:
        return n
    for t in range(cap, 0, -8):
        if n % t == 0:
            return t
    return n


def topm_attention_core(qkv, *, num_heads, top_m, out_dtype, tq=None):
    """qkv: (B, N, 3C) -> (B, N, C) with heads already merged."""
    B, N, C3 = qkv.shape
    C = C3 // 3
    D = C // num_heads
    scale = D ** (-0.5)
    if tq is None:
        tq = _pick_query_tile(N)
    kernel = functools.partial(
        _topm_attn_kernel, num_heads=num_heads, head_dim=D,
        scale=scale, top_m=top_m)
    return pl.pallas_call(
        kernel,
        out_shape=jax.ShapeDtypeStruct((B, N, C), out_dtype),
        grid=(B, N // tq),
        in_specs=[
            pl.BlockSpec((1, tq, C3), lambda b, i: (b, i, 0)),  # query rows
            pl.BlockSpec((1, N, C3), lambda b, i: (b, 0, 0)),   # K/V rows
        ],
        out_specs=pl.BlockSpec((1, tq, C), lambda b, i: (b, i, 0)),
        compiler_params=pltpu.CompilerParams(
            dimension_semantics=("parallel", "parallel"),
            vmem_limit_bytes=48 * 1024 * 1024),
    )(qkv, qkv)


# ----------------------------------------------------------------------------
# Full module forward (glue in plain JAX; all matmuls / attention in Pallas)
# ----------------------------------------------------------------------------
def init_params(key, dim):
    """trunc_normal(std=0.02) ~ normal*0.02 weights (stored bf16), zero biases."""
    k1, k2 = jax.random.split(key)
    qkv_w = (jax.random.normal(k1, (dim, 3 * dim), jnp.float32) * 0.02
             ).astype(jnp.bfloat16)
    qkv_b = jnp.zeros((1, 3 * dim), jnp.float32)
    proj_w = (jax.random.normal(k2, (dim, dim), jnp.float32) * 0.02
              ).astype(jnp.bfloat16)
    proj_b = jnp.zeros((1, dim), jnp.float32)
    return dict(qkv_w=qkv_w, qkv_b=qkv_b, proj_w=proj_w, proj_b=proj_b)


def top_m_attention_forward(x, params, *, num_heads, top_m):
    B, N, C = x.shape
    assert C % num_heads == 0
    assert top_m <= N, "top_m must not exceed the sequence length"

    # qkv projection (Pallas tiled linear) -> (B, N, 3C) bf16, no transpose.
    qkv = linear(x.reshape(B * N, C), params["qkv_w"], params["qkv_b"],
                 out_dtype=jnp.bfloat16)
    qkv = qkv.reshape(B, N, 3 * C)

    # top-m attention core (Pallas kernel), output already head-merged (bf16).
    out = topm_attention_core(qkv, num_heads=num_heads, top_m=top_m,
                              out_dtype=jnp.bfloat16)  # (B, N, C)

    # output projection (Pallas tiled linear kernel), back to x.dtype.
    out = linear(out.reshape(B * N, C), params["proj_w"], params["proj_b"],
                 out_dtype=x.dtype)
    # Dropout layers are identity at inference.
    return out.reshape(B, N, C)


# ----------------------------------------------------------------------------
# Pure-JAX reference (torch.topk-style index mask), using the SAME precision
# choices (bf16 weights/intermediates, f32 accumulation) so the comparison
# validates the top-m selection / softmax logic, not dtype noise.
# ----------------------------------------------------------------------------
def reference_forward(x, params, *, num_heads, top_m):
    B, N, C = x.shape
    D = C // num_heads
    scale = D ** (-0.5)

    def lin(z, w, b, out_dtype):
        y = jnp.dot(z.astype(jnp.bfloat16), w,
                    preferred_element_type=jnp.float32) + b
        return y.astype(out_dtype)

    qkv = lin(x.reshape(B * N, C), params["qkv_w"], params["qkv_b"],
              jnp.bfloat16)
    qkv = qkv.reshape(B, N, 3, num_heads, D).transpose(2, 0, 3, 1, 4)
    q, k, v = qkv[0], qkv[1], qkv[2]                   # (B, H, N, D) bf16

    qs = (q.astype(jnp.float32) * scale).astype(jnp.bfloat16)
    attn = jnp.einsum("bhnd,bhmd->bhnm", qs, k,
                      preferred_element_type=jnp.float32)

    _, idx = jax.lax.top_k(attn, top_m)
    mask = jnp.zeros_like(attn).at[
        jnp.arange(B)[:, None, None, None],
        jnp.arange(num_heads)[None, :, None, None],
        jnp.arange(N)[None, None, :, None],
        idx,
    ].set(1.0)

    row_max = jnp.max(attn, axis=-1, keepdims=True)
    e = jnp.where(mask > 0, jnp.exp(attn - row_max), 0.0)
    denom = jnp.sum(e, axis=-1, keepdims=True)
    out = jnp.einsum("bhnm,bhmd->bhnd", e.astype(jnp.bfloat16), v,
                     preferred_element_type=jnp.float32) / denom

    out = out.transpose(0, 2, 1, 3).reshape(B * N, C).astype(jnp.bfloat16)
    out = lin(out, params["proj_w"], params["proj_b"], x.dtype)
    return out.reshape(B, N, C)


if __name__ == "__main__":
    B, N, C = 2, 16, 32
    num_heads, top_m = 4, 4

    key = jax.random.PRNGKey(0)
    kx, kp = jax.random.split(key)
    x = jax.random.normal(kx, (B, N, C), jnp.float32)
    params = init_params(kp, C)

    out = top_m_attention_forward(x, params, num_heads=num_heads, top_m=top_m)
    out = jax.block_until_ready(out)

    ref = reference_forward(x, params, num_heads=num_heads, top_m=top_m)
    assert out.shape == (B, N, C)
    max_err = float(jnp.max(jnp.abs(out - ref)))
    assert jnp.allclose(out, ref, atol=1e-3, rtol=1e-2), (
        f"mismatch vs reference, max abs err = {max_err}")

    print("KERNEL_OK")
</pallas_src>

<mosaic_0001>
module attributes {stable_mosaic.version = 11 : i64} {
  func.func @_linear_kernel(%arg0: i32, %arg1: memref<32x32xf32, #tpu.memory_space<vmem>>, %arg2: memref<32x96xbf16, #tpu.memory_space<vmem>>, %arg3: memref<1x96xf32, #tpu.memory_space<vmem>>, %arg4: memref<32x96xbf16, #tpu.memory_space<vmem>>) attributes {dimension_semantics = [#tpu.dimension_semantics<parallel>], iteration_bounds = array<i64: 1>, scalar_prefetch = 0 : i64, scratch_operands = 0 : i64, tpu.core_type = #tpu.core_type<tc>, window_params = [{transform_indices = @transform_0, window_bounds = array<i64: 32, 32>}, {pipeline_mode = #tpu.pipeline_mode<synchronous>, transform_indices = @transform_1, window_bounds = array<i64: 32, 96>}, {pipeline_mode = #tpu.pipeline_mode<synchronous>, transform_indices = @transform_2, window_bounds = array<i64: 1, 96>}, {transform_indices = @transform_3, window_bounds = array<i64: 32, 96>}]} {
    %c0 = arith.constant 0 : index
    %c0_0 = arith.constant 0 : index
    %0 = vector.load %arg1[%c0, %c0_0] : memref<32x32xf32, #tpu.memory_space<vmem>>, vector<32x32xf32>
    %1 = arith.truncf %0 : vector<32x32xf32> to vector<32x32xbf16>
    %c0_1 = arith.constant 0 : index
    %c0_2 = arith.constant 0 : index
    %2 = vector.load %arg2[%c0_1, %c0_2] : memref<32x96xbf16, #tpu.memory_space<vmem>>, vector<32x96xbf16>
    %cst = arith.constant dense<0.000000e+00> : vector<32x96xf32>
    %3 = tpu.matmul %1, %2, %cst {dimension_numbers = #tpu.dot_dimension_numbers<[1], [0], [0], [1], [0, 0, 1, 1], [], []>} : vector<32x32xbf16>, vector<32x96xbf16>, vector<32x96xf32> -> vector<32x96xf32>
    %c0_3 = arith.constant 0 : index
    %c0_4 = arith.constant 0 : index
    %4 = vector.load %arg3[%c0_3, %c0_4] : memref<1x96xf32, #tpu.memory_space<vmem>>, vector<1x96xf32>
    %5 = vector.broadcast %4 : vector<1x96xf32> to vector<32x96xf32>
    %6 = arith.addf %3, %5 : vector<32x96xf32>
    %7 = arith.truncf %6 : vector<32x96xf32> to vector<32x96xbf16>
    %c0_5 = arith.constant 0 : index
    %c0_6 = arith.constant 0 : index
    %8 = vector.load %arg4[%c0_5, %c0_6] : memref<32x96xbf16, #tpu.memory_space<vmem>>, vector<32x96xbf16>
    tpu.vector_store %arg4[%c0_5, %c0_6], %7 {strides = array<i32>} : memref<32x96xbf16, #tpu.memory_space<vmem>>, vector<32x96xbf16>,
    return
  }
  func.func @transform_0(%arg0: i32) -> (i32, i32) {
    %c0_i32 = arith.constant 0 : i32
    %c0_i32_0 = arith.constant 0 : i32
    return %arg0, %c0_i32 : i32, i32
  }
  func.func @transform_1(%arg0: i32) -> (i32, i32) {
    %c0_i32 = arith.constant 0 : i32
    %c0_i32_0 = arith.constant 0 : i32
    %c0_i32_1 = arith.constant 0 : i32
    return %c0_i32, %c0_i32_0 : i32, i32
  }
  func.func @transform_2(%arg0: i32) -> (i32, i32) {
    %c0_i32 = arith.constant 0 : i32
    %c0_i32_0 = arith.constant 0 : i32
    %c0_i32_1 = arith.constant 0 : i32
    return %c0_i32, %c0_i32_0 : i32, i32
  }
  func.func @transform_3(%arg0: i32) -> (i32, i32) {
    %c0_i32 = arith.constant 0 : i32
    %c0_i32_0 = arith.constant 0 : i32
    return %arg0, %c0_i32 : i32, i32
  }
}

</mosaic_0001>

<llo_original>
// kernel: tpu_custom_call.1
$region0: #{tpu_custom_call.1}
  #allocation0 [shape = 'u32[]', space=smem, size = 0x4, offset = 0x4, fixed_abs, tag = 'smem constant byte address 0x4 - core index']
  #allocation1 [shape = 'u32[144,128]{1,0:T(1,128)}', space=vmem, size = 0x12000, scoped, tag = 'internal scratch']
  %s0 = inlined_call_operand.hbm [shape: f32[32,32], index: 0, kind: input, shape index: {}]
  %s1 = inlined_call_operand.hbm [shape: bf16[32,96], index: 1, kind: input, shape index: {}]
  %s2 = inlined_call_operand.vmem [shape: f32[1,96], index: 2, kind: input, shape index: {}]
  %s3 = inlined_call_operand.hbm [shape: bf16[32,96], index: 3, kind: output, shape index: {}]
  %s4 = sld [smem:[#allocation0]]
  $region30: #{tpu_custom_call.1} parent=0
    _
  %s6 = ssub.s32 1, %s4
  %s7 = scalar_select 0, %s6, %s4
  $region1: #{tpu_custom_call.1} parent=0
    #allocation2 [shape = 'u8[16384]{0}', space=vmem, size = 0x4000, scoped, tag = 'input window, operand 0, single buffered']
    #allocation3 [shape = 's32[1]{0}', space=sflag, size = 0x4, scoped, tag = 'scoped memory for tpu_custom_call.1']
    #allocation4 [shape = 's32[1]{0}', space=sflag, size = 0x4, scoped, tag = 'scoped memory for tpu_custom_call.1']
    #allocation5 [shape = 'u8[8192]{0}', space=vmem, size = 0x2000, scoped, tag = 'input window, operand 1, single buffered']
    #allocation6 [shape = 's32[1]{0}', space=sflag, size = 0x4, scoped, tag = 'scoped memory for tpu_custom_call.1']
    #allocation7 [shape = 'u8[8192]{0}', space=vmem, size = 0x2000, scoped, tag = 'output window, operand 0, single buffered']
    %8 = vsyncpa [#allocation3], 0
    %9 = vsyncpa [#allocation6], 0
    %10 = vsyncpa [#allocation4], 0
    // Predicated region
    $region2: #{tpu_custom_call.1} parent=1 // pred_check
      _
    $region3: #{tpu_custom_call.1} parent=1 // pred_check_branch
      %12 = sbr.rel (0) target = $region5
    $region4: #{tpu_custom_call.1} parent=1 // pred_region
      %s14 = ssub.s32 512, 512
      %15 = vsyncadd [#allocation3], %s14
      %s16 = sshll.u32 [#allocation2], 4
      %s17 = int_to_ptr.vmem [resolvable:$true] %s16
      %22 = dma.hbm_to_vmem [thread:$0]  %s0, 512, %s17, [#allocation3], 128, 128, 8
    $region5: #{tpu_custom_call.1} parent=1 // pred_fallthru
      _
    // Predicated region
    $region6: #{tpu_custom_call.1} parent=1 // pred_check
      _
    $region7: #{tpu_custom_call.1} parent=1 // pred_check_branch
      %24 = sbr.rel (0) target = $region9
    $region8: #{tpu_custom_call.1} parent=1 // pred_region
      %s26 = ssub.s32 256, 256
      %27 = vsyncadd [#allocation6], %s26
      %s28 = sshll.u32 [#allocation5], 4
      %s29 = int_to_ptr.vmem [resolvable:$true] %s28
      %34 = dma.hbm_to_vmem [thread:$0]  %s1, 256, %s29, [#allocation6], 64, 64, 4
    $region9: #{tpu_custom_call.1} parent=1 // pred_fallthru
      _
    // Predicated region
    $region10: #{tpu_custom_call.1} parent=1 // pred_check
      _
    $region11: #{tpu_custom_call.1} parent=1 // pred_check_branch
      %36 = sbr.rel (0) target = $region13
    $region12: #{tpu_custom_call.1} parent=1 // pred_region
      _
    $region13: #{tpu_custom_call.1} parent=1 // pred_fallthru
      _
    // Predicated region
    $region14: #{tpu_custom_call.1} parent=1 // pred_check
      _
    $region15: #{tpu_custom_call.1} parent=1 // pred_check_branch
      %38 = sbr.rel (0) target = $region17
    $region16: #{tpu_custom_call.1} parent=1 // pred_region
      %39 = dma.done [#allocation3], 512
    $region17: #{tpu_custom_call.1} parent=1 // pred_fallthru
      _
    // Predicated region
    $region18: #{tpu_custom_call.1} parent=1 // pred_check
      _
    $region19: #{tpu_custom_call.1} parent=1 // pred_check_branch
      %41 = sbr.rel (0) target = $region21
    $region20: #{tpu_custom_call.1} parent=1 // pred_region
      %42 = dma.done [#allocation6], 256
    $region21: #{tpu_custom_call.1} parent=1 // pred_fallthru
      _
    %v44 = vld [vmem:[#allocation2] sm:$0xff]
    %v45 = vld [vmem:[#allocation2 + $0x8] sm:$0xff]
    %v46 = vld [vmem:[#allocation2 + $0x10] sm:$0xff]
    %v47 = vld [vmem:[#allocation2 + $0x18] sm:$0xff]
    %v48 = vpack.c.bf16 %v45, %v44
    %v49 = vpack.c.bf16 %v47, %v46
    %v50 = vld [vmem:[#allocation5] sm:$0xf]
    %v51 = vld [vmem:[#allocation5 + $0x4] sm:$0xf]
    %v52 = vld [vmem:[#allocation5 + $0x8] sm:$0xf]
    %v53 = vld [vmem:[#allocation5 + $0xc] sm:$0xf]
    %v54 = vld [vmem:[%s2] sm:$0x1]
    %v56 = vlaneseq
    %v57 = vshrl.u32 %v56, 7
    %v58 = vsub.s32 0, %v57
    %v59 = vrot.slane %v54, %v58
    %v65 = vunpack.c.l.b16 %v50
    %v66 = vunpack.c.l.b16 %v51
    %v67 = vunpack.c.l.b16 %v52
    %v68 = vunpack.c.l.b16 %v53
    %v69 = vpack.c.b16 %v66, %v65
    %v70 = vpack.c.b16 %v68, %v67
    %vm73 = vcmask 261120
    %v75 = vsel %vm73, %v48, 0
    %v78 = vsel %vm73, %v49, 0
    %80 = vmatprep.subr.bf16.mxu0 0
    %81 = vmatpush1.bf16.msra.mxu0 %v69
    %82 = vmatprep.subr.bf16.mxu0 0
    %83 = vmatpush1.bf16.msra.mxu0 %v70
    %84 = vmatprep.subr.bf16.mxu0 0
    %85 = vmatpush1.bf16.msra.mxu0 0
    %86 = vmatprep.subr.bf16.mxu0 0
    %87 = vmatpush1.bf16.msra.mxu0 0
    %88 = vmatprep.subr.bf16.mxu0 0
    %89 = vmatpush1.bf16.msra.mxu0 0
    %90 = vmatprep.subr.bf16.mxu0 0
    %91 = vmatpush1.bf16.msra.mxu0 0
    %92 = vmatprep.subr.bf16.mxu0 0
    %93 = vmatpush1.bf16.msra.mxu0 0
    %94 = vmatprep.subr.bf16.mxu0 0
    %95 = vmatpush1.bf16.msra.mxu0 0
    %96 = vmatprep.subr.bf16.mxu0 0
    %97 = vmatpush1.bf16.msra.mxu0 0
    %98 = vmatprep.subr.bf16.mxu0 0
    %99 = vmatpush1.bf16.msra.mxu0 0
    %100 = vmatprep.subr.bf16.mxu0 0
    %101 = vmatpush1.bf16.msra.mxu0 0
    %102 = vmatprep.subr.bf16.mxu0 0
    %103 = vmatpush1.bf16.msra.mxu0 0
    %104 = vmatprep.subr.bf16.mxu0 0
    %105 = vmatpush1.bf16.msra.mxu0 0
    %106 = vmatprep.subr.bf16.mxu0 0
    %107 = vmatpush1.bf16.msra.mxu0 0
    %108 = vmatprep.subr.bf16.mxu0 0
    %109 = vmatpush1.bf16.msra.mxu0 0
    %110 = vmatprep.subr.bf16.mxu0 0
    %111 = vmatpush1.bf16.msra.mxu0 0
    %112 = vmatprep.mubr.bf16.mxu0 0
    %113 = vmatmul.mubr.bf16.gmra.mrb[0].mxu0 %v75
    %v114 = vpop.f32.mrb[0].mxu0
    %v115 = vadd.f32 %v59, %v114
    %v116 = vpop.f32.mrb[0].mxu0
    %v117 = vpop.f32.mrb[0].mxu0
    %v118 = vadd.f32 %v59, %v117
    %v119 = vpop.f32.mrb[0].mxu0
    %120 = vmatprep.mubr.bf16.mxu0 0
    %121 = vmatmul.mubr.bf16.gmra.mrb[0].mxu0 %v78
    %v122 = vpop.f32.mrb[0].mxu0
    %v123 = vadd.f32 %v59, %v122
    %v124 = vpop.f32.mrb[0].mxu0
    %v125 = vpop.f32.mrb[0].mxu0
    %v126 = vadd.f32 %v59, %v125
    %v127 = vpop.f32.mrb[0].mxu0
    %128 = vdwg.mxu0
    %v129 = vpack.c.bf16 %v118, %v115
    %v130 = vpack.c.bf16 %v126, %v123
    %v133 = vunpack.c.l.b16 %v129
    %v134 = vunpack.c.h.b16 %v129
    %v135 = vunpack.c.l.b16 %v130
    %v136 = vunpack.c.h.b16 %v130
    %v137 = vpack.c.b16 %v133, %v133
    %v138 = vpack.c.b16 %v134, %v134
    %v139 = vpack.c.b16 %v135, %v135
    %v140 = vpack.c.b16 %v136, %v136
    %vm145 = vcmask 781312
    %146 = vst.msk [vmem:[#allocation7] sm:$0xf] %vm145, %v137
    %147 = vst.msk [vmem:[#allocation7 + $0x4] sm:$0xf] %vm145, %v138
    %148 = vst.msk [vmem:[#allocation7 + $0x8] sm:$0xf] %vm145, %v139
    %149 = vst.msk [vmem:[#allocation7 + $0xc] sm:$0xf] %vm145, %v140
    // Predicated region
    $region22: #{tpu_custom_call.1} parent=1 // pred_check
      _
    $region23: #{tpu_custom_call.1} parent=1 // pred_check_branch
      %151 = sbr.rel (0) target = $region25
    $region24: #{tpu_custom_call.1} parent=1 // pred_region
      %s153 = ssub.s32 256, 256
      %154 = vsyncadd [#allocation4], %s153
      %s155 = sshll.u32 [#allocation7], 4
      %s156 = int_to_ptr.vmem [resolvable:$true] %s155
      %161 = dma.vmem_to_hbm [thread:$0]  %s156, 256, %s3, [#allocation4], 64, 64, 4
    $region25: #{tpu_custom_call.1} parent=1 // pred_fallthru
      _
    // Predicated region
    $region26: #{tpu_custom_call.1} parent=1 // pred_check
      _
    $region27: #{tpu_custom_call.1} parent=1 // pred_check_branch
      %163 = sbr.rel (0) target = $region29
    $region28: #{tpu_custom_call.1} parent=1 // pred_region
      %164 = dma.done [#allocation4], 256
    $region29: #{tpu_custom_call.1} parent=1 // pred_fallthru
      _
    %165 = vsyncpa [#allocation3], 1
    %166 = vsyncpa [#allocation6], 1
    %167 = vsyncpa [#allocation4], 1

</llo_original>
